<compile_context>
chip_gen: v6e
topology: v6e:2x2x1
jax: 0.10.0
libtpu: 0.0.40
codegen_flags: <defaults>
</compile_context>

<pallas_src>
import functools

import jax
import jax.numpy as jnp
from jax.experimental import pallas as pl
from jax.experimental.pallas import tpu as pltpu


def _round_up(x, m):
    return ((x + m - 1) // m) * m


# ----------------------------- Pallas kernel -------------------------------- #
def _make_kernel(kh, kw, wp, c_pad, owide_pad, s_pad, nb, pad_k, compute_dtype):
    """Fused conv kernel body; all tap shifts are static Python ints."""
    shifts = [i * wp + j for i in range(kh) for j in range(kw)]
    k_taps = len(shifts) * c_pad

    def kernel(x_ref, w_ref, o_ref, xs_ref):
        # x_ref : (Nb, C_pad, S_pad)        f32  flattened zero-padded images
        # w_ref : (OC_pad, K_total)         bf16 scale-folded weights + bias cols
        # o_ref : (Nb, OC_pad, OWIDE_pad)   f32  transposed "wide-row" output
        # xs_ref: (K_total, OWIDE_pad)      bf16 scratch: stacked shifted windows
        #
        # Trailing pad_k rows of the stacked matrix are all ones; paired with a
        # weight column holding bias*scale this folds the bias into the matmul.
        xs_ref[pl.ds(k_taps, pad_k), :] = jnp.ones((pad_k, owide_pad), compute_dtype)
        w = w_ref[...]                                  # (OC_pad, K_total) bf16
        for b in range(nb):                             # static, unrolled
            x_full = x_ref[b]                           # (C_pad, S_pad) aligned load
            for t, sh in enumerate(shifts):
                if sh == 0:
                    shifted = x_full
                else:
                    # Left-shift by `sh` lanes: circular roll by (S_pad - sh)
                    # (jnp.roll convention) on the XLU; no wraparound reaches
                    # lanes < OWIDE_pad because S_pad >= OWIDE_pad + max_shift.
                    shifted = pltpu.roll(x_full, shift=s_pad - sh, axis=1)
                # Aligned prefix slice, then cast the window to bf16 (VPU).
                xs_ref[pl.ds(t * c_pad, c_pad), :] = (
                    shifted[:, :owide_pad].astype(compute_dtype))
            # Single MXU contraction: (OC_pad, K_total) @ (K_total, OWIDE_pad),
            # bf16 operands, f32 accumulation.  Bias arrives via the ones rows.
            acc = jnp.dot(w, xs_ref[...], preferred_element_type=jnp.float32)
            o_ref[b] = acc.astype(o_ref.dtype)

    return kernel


# ------------------------------- wrapper ------------------------------------ #
@functools.partial(jax.jit, static_argnames=("stride", "padding", "batch_block"))
def _custom_conv2d_impl(x, weight, bias, scale, *, stride, padding, batch_block):
    N, C, H, W = x.shape
    OC, _, KH, KW = weight.shape
    Hp, Wp = H + 2 * padding, W + 2 * padding
    OH, OW = Hp - KH + 1, Wp - KW + 1

    compute_dtype = jnp.bfloat16
    SUB = 16                                     # bf16 sublane packing
    C_pad = _round_up(C, SUB)
    OC_pad = _round_up(OC, 8)
    OWIDE = OH * Wp                              # wide rows keep the padded width
    OWIDE_pad = _round_up(OWIDE, 128)            # lane-dense output width
    max_shift = (KH - 1) * Wp + (KW - 1)
    S_pad = _round_up(OWIDE_pad + max_shift, 128)
    K_taps = KH * KW * C_pad
    PAD_K = SUB                                  # ones rows (bias fold) + alignment
    K_total = K_taps + PAD_K
    Nb = batch_block
    assert N % Nb == 0

    # ---- host-side prep (cheap, fused by XLA; NO 9x im2col blow-up) -------- #
    xp = jnp.pad(x.astype(jnp.float32),
                 ((0, 0), (0, C_pad - C), (padding, padding), (padding, padding)))
    xf = xp.reshape(N, C_pad, Hp * Wp)
    xf = jnp.pad(xf, ((0, 0), (0, 0), (0, S_pad - Hp * Wp)))

    # Fold the per-output-channel scale into weights and bias; single bf16 slab
    # with column index (i*KW + j)*C_pad + c, plus PAD_K bias columns.
    s_vec = scale.reshape(OC).astype(jnp.float32)
    w_s = weight.astype(jnp.float32) * s_vec[:, None, None, None]
    w_s = jnp.pad(w_s, ((0, OC_pad - OC), (0, C_pad - C), (0, 0), (0, 0)))
    w_mat = w_s.transpose(0, 2, 3, 1).reshape(OC_pad, K_taps)
    b_s = jnp.pad(bias.astype(jnp.float32) * s_vec, (0, OC_pad - OC))
    bias_cols = jnp.zeros((OC_pad, PAD_K), jnp.float32).at[:, 0].set(b_s)
    w_full = jnp.concatenate([w_mat, bias_cols], axis=1).astype(compute_dtype)

    kernel = _make_kernel(KH, KW, Wp, C_pad, OWIDE_pad, S_pad, Nb, PAD_K,
                          compute_dtype)

    # VMEM budget from the block sizes (double-buffered in/out) + headroom,
    # instead of a hard-coded 32 MiB.
    x_blk = Nb * C_pad * S_pad * 4
    o_blk = Nb * OC_pad * OWIDE_pad * 4
    w_blk = OC_pad * K_total * 2
    xs_blk = K_total * OWIDE_pad * 2
    vmem_bytes = int(min(100 * 1024 * 1024,
                         4 * (x_blk + o_blk) + 2 * w_blk + 2 * xs_blk
                         + 8 * 1024 * 1024))

    flops = 2 * N * OC_pad * K_total * OWIDE_pad
    bytes_accessed = int(4 * xf.size + 2 * w_full.size
                         + 4 * N * OC_pad * OWIDE_pad)

    out_wide = pl.pallas_call(
        kernel,
        out_shape=jax.ShapeDtypeStruct((N, OC_pad, OWIDE_pad), jnp.float32),
        grid_spec=pltpu.PrefetchScalarGridSpec(
            num_scalar_prefetch=0,
            grid=(N // Nb,),
            in_specs=[
                pl.BlockSpec((Nb, C_pad, S_pad), lambda n: (n, 0, 0)),
                pl.BlockSpec((OC_pad, K_total), lambda n: (0, 0)),
            ],
            out_specs=pl.BlockSpec((Nb, OC_pad, OWIDE_pad), lambda n: (n, 0, 0)),
            scratch_shapes=[pltpu.VMEM((K_total, OWIDE_pad), compute_dtype)],
        ),
        compiler_params=pltpu.CompilerParams(
            dimension_semantics=("parallel",),
            vmem_limit_bytes=vmem_bytes,
        ),
        cost_estimate=pl.CostEstimate(
            flops=flops, transcendentals=0, bytes_accessed=bytes_accessed),
    )(xf, w_full)

    # Drop padded channels and the KW-1 wrap columns per wide row.  Result is
    # already NCHW -- no transpose.  (Crop cost is negligible at these shapes;
    # see TODO above for production-shape compact stores.)
    out = out_wide[:, :OC, :OWIDE].reshape(N, OC, OH, Wp)[:, :, :, :OW]
    return out.astype(x.dtype)


def custom_conv2d(x, weight, bias, scale, *, stride=1, padding=0):
    """
    Pallas implementation of CustomConv2d.forward: (conv2d(x) + bias) * scale.

    x:      (N, C, H, W)     float32
    weight: (OC, C, KH, KW)  float32 (PyTorch Conv2d / OIHW layout)
    bias:   (OC,)            float32
    scale:  (1, OC, 1, 1)    float32
    returns (N, OC, OH, OW)  NCHW, same as the PyTorch module
    """
    if stride != 1:
        # TODO(synk): stride > 1 needs a different window-read scheme.
        raise NotImplementedError("custom_conv2d Pallas kernel supports stride=1 only")

    N = x.shape[0]
    # Single-TC chips (v5e / v6e): fold the whole batch into one grid step to
    # avoid the ~0.35us/step grid overhead and keep the weight slab resident.
    # Multi-TC / unknown parts (v7x, megacore): keep grid=(N,) "parallel".
    kind = jax.devices()[0].device_kind.lower()
    single_tc = any(t in kind for t in ("v5 lite", "v5e", "v6 lite", "v6e"))
    batch_block = N if single_tc else 1
    return _custom_conv2d_impl(x, weight, bias, scale, stride=stride,
                               padding=padding, batch_block=batch_block)


# ------------------------------- demo / check -------------------------------- #
if __name__ == "__main__":
    # Module config: CustomConv2d(in_channels=4, out_channels=8, kernel_size=3,
    #                             stride=1, padding=1, bias=True)
    N, C, H, W = 2, 4, 16, 16
    OC, KH, KW = 8, 3, 3
    stride, padding = 1, 1

    key = jax.random.PRNGKey(0)
    kx, kw_, kb, ks = jax.random.split(key, 4)
    x = jax.random.normal(kx, (N, C, H, W), dtype=jnp.float32)
    weight = jax.random.normal(kw_, (OC, C, KH, KW), dtype=jnp.float32) * 0.1
    bias = jax.random.normal(kb, (OC,), dtype=jnp.float32) * 0.1
    # Module __init__ uses torch.ones for scale; use a non-trivial deterministic
    # scale so the per-channel multiply is actually exercised.
    scale = 1.0 + 0.1 * jax.random.normal(ks, (1, OC, 1, 1), dtype=jnp.float32)

    out = custom_conv2d(x, weight, bias, scale, stride=stride, padding=padding)
    out = jax.block_until_ready(out)

    # Reference 1: exact f32 module semantics, (conv + bias) * scale.
    ref_f32 = jax.lax.conv_general_dilated(
        x, weight, window_strides=(stride, stride),
        padding=((padding, padding), (padding, padding)),
        dimension_numbers=("NCHW", "OIHW", "NCHW"))
    ref_f32 = (ref_f32 + bias.reshape(1, OC, 1, 1)) * scale

    # Reference 2: same operand rounding as the kernel (scale folded into the
    # weights before the bf16 cast, f32 accumulation) -> tight tolerance.
    w_folded = (weight * scale.reshape(OC, 1, 1, 1)).astype(jnp.bfloat16)
    ref_bf16 = jax.lax.conv_general_dilated(
        x.astype(jnp.bfloat16), w_folded, window_strides=(stride, stride),
        padding=((padding, padding), (padding, padding)),
        dimension_numbers=("NCHW", "OIHW", "NCHW"),
        preferred_element_type=jnp.float32)
    ref_bf16 = ref_bf16 + (bias * scale.reshape(OC)).astype(jnp.bfloat16).astype(
        jnp.float32).reshape(1, OC, 1, 1)

    assert out.shape == (N, OC, H, W), out.shape
    err_bf16 = float(jnp.max(jnp.abs(out - ref_bf16)))   # kernel math check
    err_f32 = float(jnp.max(jnp.abs(out - ref_f32)))     # module semantics check
    assert err_bf16 < 5e-3, ("bf16-matched reference mismatch", err_bf16)
    assert err_f32 < 5e-2, ("f32 reference mismatch", err_f32)

    print("KERNEL_OK")
</pallas_src>

<mosaic_0001>
module attributes {stable_mosaic.version = 11 : i64} {
  func.func @kernel(%arg0: i32, %arg1: memref<1x16x512xf32, #tpu.memory_space<vmem>>, %arg2: memref<8x160xbf16, #tpu.memory_space<vmem>>, %arg3: memref<1x8x384xf32, #tpu.memory_space<vmem>>, %arg4: memref<160x384xbf16, #tpu.memory_space<vmem>>) attributes {dimension_semantics = [#tpu.dimension_semantics<parallel>], iteration_bounds = array<i64: 2>, scalar_prefetch = 0 : i64, scratch_operands = 1 : i64, tpu.core_type = #tpu.core_type<tc>, window_params = [{transform_indices = @transform_0, window_bounds = array<i64: 1, 16, 512>}, {pipeline_mode = #tpu.pipeline_mode<synchronous>, transform_indices = @transform_1, window_bounds = array<i64: 8, 160>}, {transform_indices = @transform_2, window_bounds = array<i64: 1, 8, 384>}]} {
    %cst = arith.constant 1.000000e+00 : bf16
    %0 = vector.broadcast %cst : bf16 to vector<16x384xbf16>
    %c144 = arith.constant 144 : index
    %c0 = arith.constant 0 : index
    %1 = vector.load %arg4[%c144, %c0] : memref<160x384xbf16, #tpu.memory_space<vmem>>, vector<16x384xbf16>
    tpu.vector_store %arg4[%c144, %c0], %0 {strides = array<i32>} : memref<160x384xbf16, #tpu.memory_space<vmem>>, vector<16x384xbf16>,
    %c0_0 = arith.constant 0 : index
    %c0_1 = arith.constant 0 : index
    %2 = vector.load %arg2[%c0_0, %c0_1] : memref<8x160xbf16, #tpu.memory_space<vmem>>, vector<8x160xbf16>
    %c0_2 = arith.constant 0 : index
    %c0_3 = arith.constant 0 : index
    %c0_4 = arith.constant 0 : index
    %3 = vector.load %arg1[%c0_2, %c0_3, %c0_4] : memref<1x16x512xf32, #tpu.memory_space<vmem>>, vector<1x16x512xf32>
    %4 = vector.shape_cast %3 : vector<1x16x512xf32> to vector<16x512xf32>
    %5 = vector.extract_strided_slice %4 {offsets = [0, 0], sizes = [16, 384], strides = [1, 1]} : vector<16x512xf32> to vector<16x384xf32>
    %6 = arith.truncf %5 : vector<16x384xf32> to vector<16x384xbf16>
    %c0_5 = arith.constant 0 : index
    %c0_6 = arith.constant 0 : index
    %7 = vector.load %arg4[%c0_5, %c0_6] : memref<160x384xbf16, #tpu.memory_space<vmem>>, vector<16x384xbf16>
    tpu.vector_store %arg4[%c0_5, %c0_6], %6 {strides = array<i32>} : memref<160x384xbf16, #tpu.memory_space<vmem>>, vector<16x384xbf16>,
    %c511_i32 = arith.constant 511 : i32
    %8 = tpu.dynamic_rotate %4 by %c511_i32 dim 1 : vector<16x512xf32>, i32 -> vector<16x512xf32>
    %9 = vector.extract_strided_slice %8 {offsets = [0, 0], sizes = [16, 384], strides = [1, 1]} : vector<16x512xf32> to vector<16x384xf32>
    %10 = arith.truncf %9 : vector<16x384xf32> to vector<16x384xbf16>
    %c16 = arith.constant 16 : index
    %c0_7 = arith.constant 0 : index
    %11 = vector.load %arg4[%c16, %c0_7] : memref<160x384xbf16, #tpu.memory_space<vmem>>, vector<16x384xbf16>
    tpu.vector_store %arg4[%c16, %c0_7], %10 {strides = array<i32>} : memref<160x384xbf16, #tpu.memory_space<vmem>>, vector<16x384xbf16>,
    %c510_i32 = arith.constant 510 : i32
    %12 = tpu.dynamic_rotate %4 by %c510_i32 dim 1 : vector<16x512xf32>, i32 -> vector<16x512xf32>
    %13 = vector.extract_strided_slice %12 {offsets = [0, 0], sizes = [16, 384], strides = [1, 1]} : vector<16x512xf32> to vector<16x384xf32>
    %14 = arith.truncf %13 : vector<16x384xf32> to vector<16x384xbf16>
    %c32 = arith.constant 32 : index
    %c0_8 = arith.constant 0 : index
    %15 = vector.load %arg4[%c32, %c0_8] : memref<160x384xbf16, #tpu.memory_space<vmem>>, vector<16x384xbf16>
    tpu.vector_store %arg4[%c32, %c0_8], %14 {strides = array<i32>} : memref<160x384xbf16, #tpu.memory_space<vmem>>, vector<16x384xbf16>,
    %c494_i32 = arith.constant 494 : i32
    %16 = tpu.dynamic_rotate %4 by %c494_i32 dim 1 : vector<16x512xf32>, i32 -> vector<16x512xf32>
    %17 = vector.extract_strided_slice %16 {offsets = [0, 0], sizes = [16, 384], strides = [1, 1]} : vector<16x512xf32> to vector<16x384xf32>
    %18 = arith.truncf %17 : vector<16x384xf32> to vector<16x384xbf16>
    %c48 = arith.constant 48 : index
    %c0_9 = arith.constant 0 : index
    %19 = vector.load %arg4[%c48, %c0_9] : memref<160x384xbf16, #tpu.memory_space<vmem>>, vector<16x384xbf16>
    tpu.vector_store %arg4[%c48, %c0_9], %18 {strides = array<i32>} : memref<160x384xbf16, #tpu.memory_space<vmem>>, vector<16x384xbf16>,
    %c493_i32 = arith.constant 493 : i32
    %20 = tpu.dynamic_rotate %4 by %c493_i32 dim 1 : vector<16x512xf32>, i32 -> vector<16x512xf32>
    %21 = vector.extract_strided_slice %20 {offsets = [0, 0], sizes = [16, 384], strides = [1, 1]} : vector<16x512xf32> to vector<16x384xf32>
    %22 = arith.truncf %21 : vector<16x384xf32> to vector<16x384xbf16>
    %c64 = arith.constant 64 : index
    %c0_10 = arith.constant 0 : index
    %23 = vector.load %arg4[%c64, %c0_10] : memref<160x384xbf16, #tpu.memory_space<vmem>>, vector<16x384xbf16>
    tpu.vector_store %arg4[%c64, %c0_10], %22 {strides = array<i32>} : memref<160x384xbf16, #tpu.memory_space<vmem>>, vector<16x384xbf16>,
    %c492_i32 = arith.constant 492 : i32
    %24 = tpu.dynamic_rotate %4 by %c492_i32 dim 1 : vector<16x512xf32>, i32 -> vector<16x512xf32>
    %25 = vector.extract_strided_slice %24 {offsets = [0, 0], sizes = [16, 384], strides = [1, 1]} : vector<16x512xf32> to vector<16x384xf32>
    %26 = arith.truncf %25 : vector<16x384xf32> to vector<16x384xbf16>
    %c80 = arith.constant 80 : index
    %c0_11 = arith.constant 0 : index
    %27 = vector.load %arg4[%c80, %c0_11] : memref<160x384xbf16, #tpu.memory_space<vmem>>, vector<16x384xbf16>
    tpu.vector_store %arg4[%c80, %c0_11], %26 {strides = array<i32>} : memref<160x384xbf16, #tpu.memory_space<vmem>>, vector<16x384xbf16>,
    %c476_i32 = arith.constant 476 : i32
    %28 = tpu.dynamic_rotate %4 by %c476_i32 dim 1 : vector<16x512xf32>, i32 -> vector<16x512xf32>
    %29 = vector.extract_strided_slice %28 {offsets = [0, 0], sizes = [16, 384], strides = [1, 1]} : vector<16x512xf32> to vector<16x384xf32>
    %30 = arith.truncf %29 : vector<16x384xf32> to vector<16x384xbf16>
    %c96 = arith.constant 96 : index
    %c0_12 = arith.constant 0 : index
    %31 = vector.load %arg4[%c96, %c0_12] : memref<160x384xbf16, #tpu.memory_space<vmem>>, vector<16x384xbf16>
    tpu.vector_store %arg4[%c96, %c0_12], %30 {strides = array<i32>} : memref<160x384xbf16, #tpu.memory_space<vmem>>, vector<16x384xbf16>,
    %c475_i32 = arith.constant 475 : i32
    %32 = tpu.dynamic_rotate %4 by %c475_i32 dim 1 : vector<16x512xf32>, i32 -> vector<16x512xf32>
    %33 = vector.extract_strided_slice %32 {offsets = [0, 0], sizes = [16, 384], strides = [1, 1]} : vector<16x512xf32> to vector<16x384xf32>
    %34 = arith.truncf %33 : vector<16x384xf32> to vector<16x384xbf16>
    %c112 = arith.constant 112 : index
    %c0_13 = arith.constant 0 : index
    %35 = vector.load %arg4[%c112, %c0_13] : memref<160x384xbf16, #tpu.memory_space<vmem>>, vector<16x384xbf16>
    tpu.vector_store %arg4[%c112, %c0_13], %34 {strides = array<i32>} : memref<160x384xbf16, #tpu.memory_space<vmem>>, vector<16x384xbf16>,
    %c474_i32 = arith.constant 474 : i32
    %36 = tpu.dynamic_rotate %4 by %c474_i32 dim 1 : vector<16x512xf32>, i32 -> vector<16x512xf32>
    %37 = vector.extract_strided_slice %36 {offsets = [0, 0], sizes = [16, 384], strides = [1, 1]} : vector<16x512xf32> to vector<16x384xf32>
    %38 = arith.truncf %37 : vector<16x384xf32> to vector<16x384xbf16>
    %c128 = arith.constant 128 : index
    %c0_14 = arith.constant 0 : index
    %39 = vector.load %arg4[%c128, %c0_14] : memref<160x384xbf16, #tpu.memory_space<vmem>>, vector<16x384xbf16>
    tpu.vector_store %arg4[%c128, %c0_14], %38 {strides = array<i32>} : memref<160x384xbf16, #tpu.memory_space<vmem>>, vector<16x384xbf16>,
    %c0_15 = arith.constant 0 : index
    %c0_16 = arith.constant 0 : index
    %40 = vector.load %arg4[%c0_15, %c0_16] : memref<160x384xbf16, #tpu.memory_space<vmem>>, vector<160x384xbf16>
    %cst_17 = arith.constant dense<0.000000e+00> : vector<8x384xf32>
    %41 = tpu.matmul %2, %40, %cst_17 {dimension_numbers = #tpu.dot_dimension_numbers<[1], [0], [0], [1], [0, 0, 1, 1], [], []>} : vector<8x160xbf16>, vector<160x384xbf16>, vector<8x384xf32> -> vector<8x384xf32>
    %c0_18 = arith.constant 0 : index
    %c0_19 = arith.constant 0 : index
    %c0_20 = arith.constant 0 : index
    %42 = vector.load %arg3[%c0_18, %c0_19, %c0_20] : memref<1x8x384xf32, #tpu.memory_space<vmem>>, vector<1x8x384xf32>
    %43 = vector.shape_cast %42 : vector<1x8x384xf32> to vector<8x384xf32>
    %44 = vector.shape_cast %41 : vector<8x384xf32> to vector<1x8x384xf32>
    tpu.vector_store %arg3[%c0_18, %c0_19, %c0_20], %44 {strides = array<i32>} : memref<1x8x384xf32, #tpu.memory_space<vmem>>, vector<1x8x384xf32>,
    return
  }
  func.func @transform_0(%arg0: i32) -> (i32, i32, i32) {
    %c0_i32 = arith.constant 0 : i32
    %c0_i32_0 = arith.constant 0 : i32
    %c0_i32_1 = arith.constant 0 : i32
    return %arg0, %c0_i32, %c0_i32_0 : i32, i32, i32
  }
  func.func @transform_1(%arg0: i32) -> (i32, i32) {
    %c0_i32 = arith.constant 0 : i32
    %c0_i32_0 = arith.constant 0 : i32
    %c0_i32_1 = arith.constant 0 : i32
    return %c0_i32, %c0_i32_0 : i32, i32
  }
  func.func @transform_2(%arg0: i32) -> (i32, i32, i32) {
    %c0_i32 = arith.constant 0 : i32
    %c0_i32_0 = arith.constant 0 : i32
    %c0_i32_1 = arith.constant 0 : i32
    return %arg0, %c0_i32, %c0_i32_0 : i32, i32, i32
  }
}

</mosaic_0001>

<llo_original>
// kernel: _custom_conv2d_impl.1
$region0: #{_custom_conv2d_impl.1}
  #allocation0 [shape = 'u32[]', space=smem, size = 0x4, offset = 0x4, fixed_abs, tag = 'smem constant byte address 0x4 - core index']
  #allocation1 [shape = 'u32[144,128]{1,0:T(1,128)}', space=vmem, size = 0x12000, scoped, tag = 'internal scratch']
  #allocation2 [shape = 'bf16[160,384]{1,0:T(8,128)(2,1)}', space=vmem, size = 0x1e000, scoped, tag = 'scratch operand']
  %s0 = inlined_call_operand.vmem [shape: f32[2,16,512], index: 0, kind: input, shape index: {}]
  %s1 = inlined_call_operand.vmem [shape: bf16[8,160], index: 1, kind: input, shape index: {}]
  %s2 = inlined_call_operand.vmem [shape: f32[2,8,384], index: 2, kind: output, shape index: {}]
  %s3 = sld [smem:[#allocation0]]
  $region41: #{_custom_conv2d_impl.1} parent=0
    _
  %s5 = ssub.s32 1, %s3
  %s6 = scalar_select 0, %s5, %s3
  loop: start=0, step=1, limit=4
  $region2: #{_custom_conv2d_impl.1} parent=0 // loop_pre_header
    _
  $region3: #{_custom_conv2d_impl.1} parent=0 // loop_header
    %s8 = sphi 0, %s12
    %p9 = scmp.ge.s32.totalorder %s8, 4
    %s18 = sphi 0, %s20
    %s21 = sphi 0, %s18
    %s22 = sphi 0, %s21
    %s38 = sphi 0, %s22
    %s42 = sphi 0, %s42
    %s44 = sphi 0, %s42
    %s45 = sphi 0, %s44
    %s59 = sphi 0, %s45
    %s65 = sphi 0, %s67
    %s68 = sphi 0, %s65
    %s69 = sphi 0, %s68
    %s85 = sphi 0, %s69
  $region4: #{_custom_conv2d_impl.1} parent=0 // loop_header_branch
    %11 = sbr.rel (%p9) target = $region8
  $region5: #{_custom_conv2d_impl.1} parent=0 // loop_body
    %s13 = ssub.s32 %s8, 1
    %s14 = ssub.s32 %s8, 2
    %s15 = sadd.s32 %s8, 1
    %s16 = ssub.s32 %s8, %s15
    %p17 = scmp.eq.s32.totalorder %s16, 0
    %s19 = sadd.s32 %s18, 1
    %s20 = scalar_select %p17, %s18, %s19
    %p23 = pneg %p17
    %p24 = scmp.eq.s32.totalorder %s8, 1
    %p25 = por %p23, %p24
    %p26 = scmp.ne.s32.totalorder %s18, %s21
    %p27 = scmp.eq.s32.totalorder %s8, 0
    %p28 = por %p26, %p27
    %p29 = scmp.ne.s32.totalorder %s18, %s21
    %p30 = scmp.eq.s32.totalorder %s13, 1
    %p31 = por %p29, %p30
    %p32 = scmp.ne.s32.totalorder %s21, %s22
    %p33 = scmp.eq.s32.totalorder %s13, 0
    %p34 = por %p32, %p33
    %p35 = scmp.ne.s32.totalorder %s21, %s22
    %p36 = scmp.eq.s32.totalorder %s14, 1
    %p37 = por %p35, %p36
    %p39 = scmp.ne.s32.totalorder %s22, %s38
    %p40 = scmp.eq.s32.totalorder %s14, 0
    %p41 = por %p39, %p40
    %s43 = sadd.s32 %s42, 1
    %p46 = scmp.eq.s32.totalorder %s8, 1
    %p47 = scmp.ne.s32.totalorder %s42, %s44
    %p48 = scmp.eq.s32.totalorder %s8, 0
    %p49 = por %p47, %p48
    %p50 = scmp.ne.s32.totalorder %s42, %s44
    %p51 = scmp.eq.s32.totalorder %s13, 1
    %p52 = por %p50, %p51
    %p53 = scmp.ne.s32.totalorder %s44, %s45
    %p54 = scmp.eq.s32.totalorder %s13, 0
    %p55 = por %p53, %p54
    %p56 = scmp.ne.s32.totalorder %s44, %s45
    %p57 = scmp.eq.s32.totalorder %s14, 1
    %p58 = por %p56, %p57
    %p60 = scmp.ne.s32.totalorder %s45, %s59
    %p61 = scmp.eq.s32.totalorder %s14, 0
    %p62 = por %p60, %p61
    %s63 = ssub.s32 %s8, %s15
    %p64 = scmp.eq.s32.totalorder %s63, 0
    %s66 = sadd.s32 %s65, 1
    %s67 = scalar_select %p64, %s65, %s66
    %p70 = pneg %p64
    %p71 = scmp.eq.s32.totalorder %s8, 1
    %p72 = por %p70, %p71
    %p73 = scmp.ne.s32.totalorder %s65, %s68
    %p74 = scmp.eq.s32.totalorder %s8, 0
    %p75 = por %p73, %p74
    %p76 = scmp.ne.s32.totalorder %s65, %s68
    %p77 = scmp.eq.s32.totalorder %s13, 1
    %p78 = por %p76, %p77
    %p79 = scmp.ne.s32.totalorder %s68, %s69
    %p80 = scmp.eq.s32.totalorder %s13, 0
    %p81 = por %p79, %p80
    %p82 = scmp.ne.s32.totalorder %s68, %s69
    %p83 = scmp.eq.s32.totalorder %s14, 1
    %p84 = por %p82, %p83
    %p86 = scmp.ne.s32.totalorder %s69, %s85
    %p87 = scmp.eq.s32.totalorder %s14, 0
    %p88 = por %p86, %p87
    %p89 = scmp.le.s32.totalorder 1, %s8
    %p90 = scmp.lt.s32.totalorder %s8, 3
    %p91 = pnand %p89, %p90
    %p92 = pneg %p91
    // Predicated region
    $region9: #{_custom_conv2d_impl.1} parent=5 // pred_check
      _
    $region10: #{_custom_conv2d_impl.1} parent=5 // pred_check_branch
      %94 = sbr.rel (%p91) target = $region12
    $region11: #{_custom_conv2d_impl.1} parent=5 // pred_region
      %s95 = ssub.s32 %s8, 1
      // Predicated region
      $region13: #{_custom_conv2d_impl.1} parent=11 // pred_check
        %p96 = pneg %p55
      $region14: #{_custom_conv2d_impl.1} parent=11 // pred_check_branch
        %98 = sbr.rel (%p96) target = $region16
      $region15: #{_custom_conv2d_impl.1} parent=11 // pred_region
        _
      $region16: #{_custom_conv2d_impl.1} parent=11 // pred_fallthru
        _
    $region12: #{_custom_conv2d_impl.1} parent=5 // pred_fallthru
      _
    %p99 = scmp.lt.s32.totalorder %s8, 2
    // Predicated region
    $region17: #{_custom_conv2d_impl.1} parent=5 // pred_check
      %p100 = pneg %p99
    $region18: #{_custom_conv2d_impl.1} parent=5 // pred_check_branch
      %102 = sbr.rel (%p100) target = $region20
    $region19: #{_custom_conv2d_impl.1} parent=5 // pred_region
      // Predicated region
      $region21: #{_custom_conv2d_impl.1} parent=19 // pred_check
        %p103 = pneg %p28
      $region22: #{_custom_conv2d_impl.1} parent=19 // pred_check_branch
        %105 = sbr.rel (%p103) target = $region24
      $region23: #{_custom_conv2d_impl.1} parent=19 // pred_region
        %p106 = scmp.lt.s32.totalorder %s8, 1
        %s107 = scalar_select %p106, %s8, 1
        %s108 = smul.addr %s107, 8
        %s109 = smul.addr %s108, 8
        %s110 = scalar_lea.vmem %s0, %s109
      $region24: #{_custom_conv2d_impl.1} parent=19 // pred_fallthru
        _
    $region20: #{_custom_conv2d_impl.1} parent=5 // pred_fallthru
      _
    %p111 = scmp.le.s32.totalorder 1, %s8
    %p112 = scmp.lt.s32.totalorder %s8, 3
    %p113 = pnand %p111, %p112
    %p114 = pneg %p113
    // Predicated region
    $region25: #{_custom_conv2d_impl.1} parent=5 // pred_check
      _
    $region26: #{_custom_conv2d_impl.1} parent=5 // pred_check_branch
      %116 = sbr.rel (%p113) target = $region28
    $region27: #{_custom_conv2d_impl.1} parent=5 // pred_region
      %s117 = ssub.s32 %s8, 1
      %p118 = scmp.lt.s32.totalorder %s13, 1
      %s119 = scalar_select %p118, %s13, 1
      %s120 = smul.addr %s119, 8
      %s121 = smul.addr %s120, 8
      %s122 = scalar_lea.vmem %s0, %s121
      %p123 = pneg %p34
      %p124 = pneg %p31
      %p125 = pneg %p55
      %p126 = pneg %p52
      %p127 = pneg %p81
      %p128 = pneg %p78
      %p129 = scmp.lt.s32.totalorder %s13, 1
      %s130 = scalar_select %p129, %s13, 1
      %s131 = smul.addr %s130, 3
      %s132 = smul.addr %s131, 8
      %s133 = scalar_lea.vmem %s2, %s132
      %p134 = scmp.lt.s32.totalorder %s13, 1
      %s135 = scalar_select %p134, %s13, 1
      %s136 = smul.addr %s135, 8
      %s137 = smul.addr %s136, 8
      %s138 = scalar_lea.vmem %s0, %s137
      %p139 = scmp.lt.s32.totalorder %s13, 1
      %s140 = scalar_select %p139, %s13, 1
      %s141 = smul.addr %s140, 3
      %s142 = smul.addr %s141, 8
      %s143 = scalar_lea.vmem %s2, %s142
      %146 = vst [vmem:[#allocation2 + $0xd8] sm:$0xff] 1065369472
      %147 = vst [vmem:[#allocation2 + $0xe0] sm:$0xf] 1065369472
      %148 = vst [vmem:[#allocation2 + $0xe4] sm:$0xff] 1065369472
      %149 = vst [vmem:[#allocation2 + $0xec] sm:$0xf] 1065369472
      %v150 = vld [vmem:[%s1] sm:$0xff]
      %v151 = vld [vmem:[%s138] sm:$0xff]
      %v152 = vld [vmem:[%s138 + $0x8] sm:$0xff]
      %v153 = vld [vmem:[%s138 + $0x10] sm:$0xff]
      %v154 = vld [vmem:[%s138 + $0x18] sm:$0xff]
      %v155 = vld [vmem:[%s138 + $0x20] sm:$0xff]
      %v156 = vld [vmem:[%s138 + $0x28] sm:$0xff]
      %v157 = vld [vmem:[%s138 + $0x30] sm:$0xff]
      %v158 = vld [vmem:[%s138 + $0x38] sm:$0xff]
      %v159 = vpack.c.bf16 %v155, %v151
      %v160 = vpack.c.bf16 %v156, %v152
      %v161 = vpack.c.bf16 %v157, %v153
      %v165 = vunpack.c.l.b16 %v159
      %v166 = vunpack.c.l.b16 %v160
      %v167 = vunpack.c.l.b16 %v161
      %v168 = vunpack.c.h.b16 %v159
      %v169 = vunpack.c.h.b16 %v160
      %v170 = vunpack.c.h.b16 %v161
      %v171 = vpack.c.b16 %v166, %v165
      %v172 = vpack.c.b16 %v167, %v167
      %v173 = vpack.c.b16 %v169, %v168
      %v174 = vpack.c.b16 %v170, %v170
      %179 = vst [vmem:[#allocation2] sm:$0xff] %v171
      %180 = vst [vmem:[#allocation2 + $0x8] sm:$0xf] %v172
      %181 = vst [vmem:[#allocation2 + $0xc] sm:$0xff] %v173
      %182 = vst [vmem:[#allocation2 + $0x14] sm:$0xf] %v174
      %183 = vrot.lane.b32.xlu0 %v151, 127
      %v184 = vpop.permute.xlu0 %183
      %185 = vrot.lane.b32.xlu0 %v155, 127
      %v186 = vpop.permute.xlu0 %185
      %187 = vrot.lane.b32.xlu0 %v152, 127
      %v188 = vpop.permute.xlu0 %187
      %189 = vrot.lane.b32.xlu0 %v156, 127
      %v190 = vpop.permute.xlu0 %189
      %191 = vrot.lane.b32.xlu0 %v153, 127
      %v192 = vpop.permute.xlu0 %191
      %193 = vrot.lane.b32.xlu0 %v157, 127
      %v194 = vpop.permute.xlu0 %193
      %195 = vrot.lane.b32.xlu0 %v154, 127
      %v196 = vpop.permute.xlu0 %195
      %197 = vrot.lane.b32.xlu0 %v158, 127
      %v198 = vpop.permute.xlu0 %197
      %v199 = vlaneseq
      %v200 = vand.u32 %v199, 127
      %vm201 = vcmp.lt.s32.totalorder %v200, 127
      %v202 = vsel %vm201, %v192, %v196
      %v203 = vsel %vm201, %v194, %v198
      %v204 = vsel %vm201, %v188, %v192
      %v205 = vsel %vm201, %v190, %v194
      %v206 = vsel %vm201, %v184, %v188
      %v207 = vsel %vm201, %v186, %v190
      %v208 = vpack.c.bf16 %v207, %v206
      %v209 = vpack.c.bf16 %v205, %v204
      %v210 = vpack.c.bf16 %v203, %v202
      %v214 = vunpack.c.l.b16 %v208
      %v215 = vunpack.c.l.b16 %v209
      %v216 = vunpack.c.l.b16 %v210
      %v217 = vunpack.c.h.b16 %v208
      %v218 = vunpack.c.h.b16 %v209
      %v219 = vunpack.c.h.b16 %v210
      %v220 = vpack.c.b16 %v215, %v214
      %v221 = vpack.c.b16 %v216, %v216
      %v222 = vpack.c.b16 %v218, %v217
      %v223 = vpack.c.b16 %v219, %v219
      %228 = vst [vmem:[#allocation2 + $0x18] sm:$0xff] %v220
      %229 = vst [vmem:[#allocation2 + $0x20] sm:$0xf] %v221
      %230 = vst [vmem:[#allocation2 + $0x24] sm:$0xff] %v222
      %231 = vst [vmem:[#allocation2 + $0x2c] sm:$0xf] %v223
      %232 = vrot.lane.b32.xlu0 %v151, 126
      %v233 = vpop.permute.xlu0 %232
      %234 = vrot.lane.b32.xlu0 %v155, 126
      %v235 = vpop.permute.xlu0 %234
      %236 = vrot.lane.b32.xlu0 %v152, 126
      %v237 = vpop.permute.xlu0 %236
      %238 = vrot.lane.b32.xlu0 %v156, 126
      %v239 = vpop.permute.xlu0 %238
      %240 = vrot.lane.b32.xlu0 %v153, 126
      %v241 = vpop.permute.xlu0 %240
      %242 = vrot.lane.b32.xlu0 %v157, 126
      %v243 = vpop.permute.xlu0 %242
      %244 = vrot.lane.b32.xlu0 %v154, 126
      %v245 = vpop.permute.xlu0 %244
      %246 = vrot.lane.b32.xlu0 %v158, 126
      %v247 = vpop.permute.xlu0 %246
      %vm248 = vcmp.lt.s32.totalorder %v200, 126
      %v249 = vsel %vm248, %v241, %v245
      %v250 = vsel %vm248, %v243, %v247
      %v251 = vsel %vm248, %v237, %v241
      %v252 = vsel %vm248, %v239, %v243
      %v253 = vsel %vm248, %v233, %v237
      %v254 = vsel %vm248, %v235, %v239
      %v255 = vpack.c.bf16 %v254, %v253
      %v256 = vpack.c.bf16 %v252, %v251
      %v257 = vpack.c.bf16 %v250, %v249
      %v261 = vunpack.c.l.b16 %v255
      %v262 = vunpack.c.l.b16 %v256
      %v263 = vunpack.c.l.b16 %v257
      %v264 = vunpack.c.h.b16 %v255
      %v265 = vunpack.c.h.b16 %v256
      %v266 = vunpack.c.h.b16 %v257
      %v267 = vpack.c.b16 %v262, %v261
      %v268 = vpack.c.b16 %v263, %v263
      %v269 = vpack.c.b16 %v265, %v264
      %v270 = vpack.c.b16 %v266, %v266
      %275 = vst [vmem:[#allocation2 + $0x30] sm:$0xff] %v267
      %276 = vst [vmem:[#allocation2 + $0x38] sm:$0xf] %v268
      %277 = vst [vmem:[#allocation2 + $0x3c] sm:$0xff] %v269
      %278 = vst [vmem:[#allocation2 + $0x44] sm:$0xf] %v270
      %279 = vrot.lane.b32.xlu0 %v151, 110
      %v280 = vpop.permute.xlu0 %279
      %281 = vrot.lane.b32.xlu0 %v155, 110
      %v282 = vpop.permute.xlu0 %281
      %283 = vrot.lane.b32.xlu0 %v152, 110
      %v284 = vpop.permute.xlu0 %283
      %285 = vrot.lane.b32.xlu0 %v156, 110
      %v286 = vpop.permute.xlu0 %285
      %287 = vrot.lane.b32.xlu0 %v153, 110
      %v288 = vpop.permute.xlu0 %287
      %289 = vrot.lane.b32.xlu0 %v157, 110
      %v290 = vpop.permute.xlu0 %289
      %291 = vrot.lane.b32.xlu0 %v154, 110
      %v292 = vpop.permute.xlu0 %291
      %293 = vrot.lane.b32.xlu0 %v158, 110
      %v294 = vpop.permute.xlu0 %293
      %vm295 = vcmp.lt.s32.totalorder %v200, 110
      %v296 = vsel %vm295, %v288, %v292
      %v297 = vsel %vm295, %v290, %v294
      %v298 = vsel %vm295, %v284, %v288
      %v299 = vsel %vm295, %v286, %v290
      %v300 = vsel %vm295, %v280, %v284
      %v301 = vsel %vm295, %v282, %v286
      %v302 = vpack.c.bf16 %v301, %v300
      %v303 = vpack.c.bf16 %v299, %v298
      %v304 = vpack.c.bf16 %v297, %v296
      %v308 = vunpack.c.l.b16 %v302
      %v309 = vunpack.c.l.b16 %v303
      %v310 = vunpack.c.l.b16 %v304
      %v311 = vunpack.c.h.b16 %v302
      %v312 = vunpack.c.h.b16 %v303
      %v313 = vunpack.c.h.b16 %v304
      %v314 = vpack.c.b16 %v309, %v308
      %v315 = vpack.c.b16 %v310, %v310
      %v316 = vpack.c.b16 %v312, %v311
      %v317 = vpack.c.b16 %v313, %v313
      %322 = vst [vmem:[#allocation2 + $0x48] sm:$0xff] %v314
      %323 = vst [vmem:[#allocation2 + $0x50] sm:$0xf] %v315
      %324 = vst [vmem:[#allocation2 + $0x54] sm:$0xff] %v316
      %325 = vst [vmem:[#allocation2 + $0x5c] sm:$0xf] %v317
      %326 = vrot.lane.b32.xlu0 %v151, 109
      %v327 = vpop.permute.xlu0 %326
      %328 = vrot.lane.b32.xlu0 %v155, 109
      %v329 = vpop.permute.xlu0 %328
      %330 = vrot.lane.b32.xlu0 %v152, 109
      %v331 = vpop.permute.xlu0 %330
      %332 = vrot.lane.b32.xlu0 %v156, 109
      %v333 = vpop.permute.xlu0 %332
      %334 = vrot.lane.b32.xlu0 %v153, 109
      %v335 = vpop.permute.xlu0 %334
      %336 = vrot.lane.b32.xlu0 %v157, 109
      %v337 = vpop.permute.xlu0 %336
      %338 = vrot.lane.b32.xlu0 %v154, 109
      %v339 = vpop.permute.xlu0 %338
      %340 = vrot.lane.b32.xlu0 %v158, 109
      %v341 = vpop.permute.xlu0 %340
      %vm342 = vcmp.lt.s32.totalorder %v200, 109
      %v343 = vsel %vm342, %v335, %v339
      %v344 = vsel %vm342, %v337, %v341
      %v345 = vsel %vm342, %v331, %v335
      %v346 = vsel %vm342, %v333, %v337
      %v347 = vsel %vm342, %v327, %v331
      %v348 = vsel %vm342, %v329, %v333
      %v349 = vpack.c.bf16 %v348, %v347
      %v350 = vpack.c.bf16 %v346, %v345
      %v351 = vpack.c.bf16 %v344, %v343
      %v355 = vunpack.c.l.b16 %v349
      %v356 = vunpack.c.l.b16 %v350
      %v357 = vunpack.c.l.b16 %v351
      %v358 = vunpack.c.h.b16 %v349
      %v359 = vunpack.c.h.b16 %v350
      %v360 = vunpack.c.h.b16 %v351
      %v361 = vpack.c.b16 %v356, %v355
      %v362 = vpack.c.b16 %v357, %v357
      %v363 = vpack.c.b16 %v359, %v358
      %v364 = vpack.c.b16 %v360, %v360
      %369 = vst [vmem:[#allocation2 + $0x60] sm:$0xff] %v361
      %370 = vst [vmem:[#allocation2 + $0x68] sm:$0xf] %v362
      %371 = vst [vmem:[#allocation2 + $0x6c] sm:$0xff] %v363
      %372 = vst [vmem:[#allocation2 + $0x74] sm:$0xf] %v364
      %373 = vrot.lane.b32.xlu0 %v151, 108
      %v374 = vpop.permute.xlu0 %373
      %375 = vrot.lane.b32.xlu0 %v155, 108
      %v376 = vpop.permute.xlu0 %375
      %377 = vrot.lane.b32.xlu0 %v152, 108
      %v378 = vpop.permute.xlu0 %377
      %379 = vrot.lane.b32.xlu0 %v156, 108
      %v380 = vpop.permute.xlu0 %379
      %381 = vrot.lane.b32.xlu0 %v153, 108
      %v382 = vpop.permute.xlu0 %381
      %383 = vrot.lane.b32.xlu0 %v157, 108
      %v384 = vpop.permute.xlu0 %383
      %385 = vrot.lane.b32.xlu0 %v154, 108
      %v386 = vpop.permute.xlu0 %385
      %387 = vrot.lane.b32.xlu0 %v158, 108
      %v388 = vpop.permute.xlu0 %387
      %vm389 = vcmp.lt.s32.totalorder %v200, 108
      %v390 = vsel %vm389, %v382, %v386
      %v391 = vsel %vm389, %v384, %v388
      %v392 = vsel %vm389, %v378, %v382
      %v393 = vsel %vm389, %v380, %v384
      %v394 = vsel %vm389, %v374, %v378
      %v395 = vsel %vm389, %v376, %v380
      %v396 = vpack.c.bf16 %v395, %v394
      %v397 = vpack.c.bf16 %v393, %v392
      %v398 = vpack.c.bf16 %v391, %v390
      %v402 = vunpack.c.l.b16 %v396
      %v403 = vunpack.c.l.b16 %v397
      %v404 = vunpack.c.l.b16 %v398
      %v405 = vunpack.c.h.b16 %v396
      %v406 = vunpack.c.h.b16 %v397
      %v407 = vunpack.c.h.b16 %v398
      %v408 = vpack.c.b16 %v403, %v402
      %v409 = vpack.c.b16 %v404, %v404
      %v410 = vpack.c.b16 %v406, %v405
      %v411 = vpack.c.b16 %v407, %v407
      %416 = vst [vmem:[#allocation2 + $0x78] sm:$0xff] %v408
      %417 = vst [vmem:[#allocation2 + $0x80] sm:$0xf] %v409
      %418 = vst [vmem:[#allocation2 + $0x84] sm:$0xff] %v410
      %419 = vst [vmem:[#allocation2 + $0x8c] sm:$0xf] %v411
      %420 = vrot.lane.b32.xlu0 %v151, 92
      %v421 = vpop.permute.xlu0 %420
      %422 = vrot.lane.b32.xlu0 %v155, 92
      %v423 = vpop.permute.xlu0 %422
      %424 = vrot.lane.b32.xlu0 %v152, 92
      %v425 = vpop.permute.xlu0 %424
      %426 = vrot.lane.b32.xlu0 %v156, 92
      %v427 = vpop.permute.xlu0 %426
      %428 = vrot.lane.b32.xlu0 %v153, 92
      %v429 = vpop.permute.xlu0 %428
      %430 = vrot.lane.b32.xlu0 %v157, 92
      %v431 = vpop.permute.xlu0 %430
      %432 = vrot.lane.b32.xlu0 %v154, 92
      %v433 = vpop.permute.xlu0 %432
      %434 = vrot.lane.b32.xlu0 %v158, 92
      %v435 = vpop.permute.xlu0 %434
      %vm436 = vcmp.lt.s32.totalorder %v200, 92
      %v437 = vsel %vm436, %v429, %v433
      %v438 = vsel %vm436, %v431, %v435
      %v439 = vsel %vm436, %v425, %v429
      %v440 = vsel %vm436, %v427, %v431
      %v441 = vsel %vm436, %v421, %v425
      %v442 = vsel %vm436, %v423, %v427
      %v443 = vpack.c.bf16 %v442, %v441
      %v444 = vpack.c.bf16 %v440, %v439
      %v445 = vpack.c.bf16 %v438, %v437
      %v449 = vunpack.c.l.b16 %v443
      %v450 = vunpack.c.l.b16 %v444
      %v451 = vunpack.c.l.b16 %v445
      %v452 = vunpack.c.h.b16 %v443
      %v453 = vunpack.c.h.b16 %v444
      %v454 = vunpack.c.h.b16 %v445
      %v455 = vpack.c.b16 %v450, %v449
      %v456 = vpack.c.b16 %v451, %v451
      %v457 = vpack.c.b16 %v453, %v452
      %v458 = vpack.c.b16 %v454, %v454
      %463 = vst [vmem:[#allocation2 + $0x90] sm:$0xff] %v455
      %464 = vst [vmem:[#allocation2 + $0x98] sm:$0xf] %v456
      %465 = vst [vmem:[#allocation2 + $0x9c] sm:$0xff] %v457
      %466 = vst [vmem:[#allocation2 + $0xa4] sm:$0xf] %v458
      %467 = vrot.lane.b32.xlu0 %v151, 91
      %v468 = vpop.permute.xlu0 %467
      %469 = vrot.lane.b32.xlu0 %v155, 91
      %v470 = vpop.permute.xlu0 %469
      %471 = vrot.lane.b32.xlu0 %v152, 91
      %v472 = vpop.permute.xlu0 %471
      %473 = vrot.lane.b32.xlu0 %v156, 91
      %v474 = vpop.permute.xlu0 %473
      %475 = vrot.lane.b32.xlu0 %v153, 91
      %v476 = vpop.permute.xlu0 %475
      %477 = vrot.lane.b32.xlu0 %v157, 91
      %v478 = vpop.permute.xlu0 %477
      %479 = vrot.lane.b32.xlu0 %v154, 91
      %v480 = vpop.permute.xlu0 %479
      %481 = vrot.lane.b32.xlu0 %v158, 91
      %v482 = vpop.permute.xlu0 %481
      %vm483 = vcmp.lt.s32.totalorder %v200, 91
      %v484 = vsel %vm483, %v476, %v480
      %v485 = vsel %vm483, %v478, %v482
      %v486 = vsel %vm483, %v472, %v476
      %v487 = vsel %vm483, %v474, %v478
      %v488 = vsel %vm483, %v468, %v472
      %v489 = vsel %vm483, %v470, %v474
      %v490 = vpack.c.bf16 %v489, %v488
      %v491 = vpack.c.bf16 %v487, %v486
      %v492 = vpack.c.bf16 %v485, %v484
      %v496 = vunpack.c.l.b16 %v490
      %v497 = vunpack.c.l.b16 %v491
      %v498 = vunpack.c.l.b16 %v492
      %v499 = vunpack.c.h.b16 %v490
      %v500 = vunpack.c.h.b16 %v491
      %v501 = vunpack.c.h.b16 %v492
      %v502 = vpack.c.b16 %v497, %v496
      %v503 = vpack.c.b16 %v498, %v498
      %v504 = vpack.c.b16 %v500, %v499
      %v505 = vpack.c.b16 %v501, %v501
      %510 = vst [vmem:[#allocation2 + $0xa8] sm:$0xff] %v502
      %511 = vst [vmem:[#allocation2 + $0xb0] sm:$0xf] %v503
      %512 = vst [vmem:[#allocation2 + $0xb4] sm:$0xff] %v504
      %513 = vst [vmem:[#allocation2 + $0xbc] sm:$0xf] %v505
      %514 = vrot.lane.b32.xlu0 %v151, 90
      %v515 = vpop.permute.xlu0 %514
      %516 = vrot.lane.b32.xlu0 %v155, 90
      %v517 = vpop.permute.xlu0 %516
      %518 = vrot.lane.b32.xlu0 %v152, 90
      %v519 = vpop.permute.xlu0 %518
      %520 = vrot.lane.b32.xlu0 %v156, 90
      %v521 = vpop.permute.xlu0 %520
      %522 = vrot.lane.b32.xlu0 %v153, 90
      %v523 = vpop.permute.xlu0 %522
      %524 = vrot.lane.b32.xlu0 %v157, 90
      %v525 = vpop.permute.xlu0 %524
      %526 = vrot.lane.b32.xlu0 %v154, 90
      %v527 = vpop.permute.xlu0 %526
      %528 = vrot.lane.b32.xlu0 %v158, 90
      %v529 = vpop.permute.xlu0 %528
      %vm530 = vcmp.lt.s32.totalorder %v200, 90
      %v531 = vsel %vm530, %v523, %v527
      %v532 = vsel %vm530, %v525, %v529
      %v533 = vsel %vm530, %v519, %v523
      %v534 = vsel %vm530, %v521, %v525
      %v535 = vsel %vm530, %v515, %v519
      %v536 = vsel %vm530, %v517, %v521
      %v537 = vpack.c.bf16 %v536, %v535
      %v538 = vpack.c.bf16 %v534, %v533
      %v539 = vpack.c.bf16 %v532, %v531
      %v543 = vunpack.c.l.b16 %v537
      %v544 = vunpack.c.l.b16 %v538
      %v545 = vunpack.c.l.b16 %v539
      %v546 = vunpack.c.h.b16 %v537
      %v547 = vunpack.c.h.b16 %v538
      %v548 = vunpack.c.h.b16 %v539
      %v549 = vpack.c.b16 %v544, %v543
      %v550 = vpack.c.b16 %v545, %v545
      %v551 = vpack.c.b16 %v547, %v546
      %v552 = vpack.c.b16 %v548, %v548
      %557 = vst [vmem:[#allocation2 + $0xc0] sm:$0xff] %v549
      %558 = vst [vmem:[#allocation2 + $0xc8] sm:$0xf] %v550
      %559 = vst [vmem:[#allocation2 + $0xcc] sm:$0xff] %v551
      %560 = vst [vmem:[#allocation2 + $0xd4] sm:$0xf] %v552
      %v561 = vld [vmem:[#allocation2] sm:$0xff]
      %v562 = vld [vmem:[#allocation2 + $0x8] sm:$0xf]
      %v563 = vld [vmem:[#allocation2 + $0xc] sm:$0xff]
      %v564 = vld [vmem:[#allocation2 + $0x14] sm:$0xf]
      %v565 = vld [vmem:[#allocation2 + $0x18] sm:$0xff]
      %v566 = vld [vmem:[#allocation2 + $0x20] sm:$0xf]
      %v567 = vld [vmem:[#allocation2 + $0x24] sm:$0xff]
      %v568 = vld [vmem:[#allocation2 + $0x2c] sm:$0xf]
      %v569 = vld [vmem:[#allocation2 + $0x30] sm:$0xff]
      %v570 = vld [vmem:[#allocation2 + $0x38] sm:$0xf]
      %v571 = vld [vmem:[#allocation2 + $0x3c] sm:$0xff]
      %v572 = vld [vmem:[#allocation2 + $0x44] sm:$0xf]
      %v573 = vld [vmem:[#allocation2 + $0x48] sm:$0xff]
      %v574 = vld [vmem:[#allocation2 + $0x50] sm:$0xf]
      %v575 = vld [vmem:[#allocation2 + $0x54] sm:$0xff]
      %v576 = vld [vmem:[#allocation2 + $0x5c] sm:$0xf]
      %v577 = vld [vmem:[#allocation2 + $0x60] sm:$0xff]
      %v578 = vld [vmem:[#allocation2 + $0x68] sm:$0xf]
      %v579 = vld [vmem:[#allocation2 + $0x6c] sm:$0xff]
      %v580 = vld [vmem:[#allocation2 + $0x74] sm:$0xf]
      %v581 = vld [vmem:[#allocation2 + $0x78] sm:$0xff]
      %v582 = vld [vmem:[#allocation2 + $0x80] sm:$0xf]
      %v583 = vld [vmem:[#allocation2 + $0x84] sm:$0xff]
      %v584 = vld [vmem:[#allocation2 + $0x8c] sm:$0xf]
      %v585 = vld [vmem:[#allocation2 + $0x90] sm:$0xff]
      %v586 = vld [vmem:[#allocation2 + $0x98] sm:$0xf]
      %v587 = vld [vmem:[#allocation2 + $0x9c] sm:$0xff]
      %v588 = vld [vmem:[#allocation2 + $0xa4] sm:$0xf]
      %v589 = vld [vmem:[#allocation2 + $0xa8] sm:$0xff]
      %v590 = vld [vmem:[#allocation2 + $0xb0] sm:$0xf]
      %v591 = vld [vmem:[#allocation2 + $0xb4] sm:$0xff]
      %v592 = vld [vmem:[#allocation2 + $0xbc] sm:$0xf]
      %v593 = vld [vmem:[#allocation2 + $0xc0] sm:$0xff]
      %v594 = vld [vmem:[#allocation2 + $0xc8] sm:$0xf]
      %v595 = vld [vmem:[#allocation2 + $0xcc] sm:$0xff]
      %v596 = vld [vmem:[#allocation2 + $0xd4] sm:$0xf]
      %v597 = vld [vmem:[#allocation2 + $0xd8] sm:$0xff]
      %v598 = vld [vmem:[#allocation2 + $0xe0] sm:$0xf]
      %v599 = vld [vmem:[#allocation2 + $0xe4] sm:$0xff]
      %v600 = vld [vmem:[#allocation2 + $0xec] sm:$0xf]
      %v602 = vunpack.c.l.b16 %v150
      %v603 = vunpack.c.h.b16 %v150
      %v604 = vpack.c.b16 %v602, %v602
      %v605 = vpack.c.b16 %v603, %v603
      %v647 = vunpack.c.l.b16 %v561
      %v648 = vunpack.c.h.b16 %v561
      %v649 = vunpack.c.l.b16 %v562
      %v650 = vunpack.c.l.b16 %v563
      %v651 = vunpack.c.h.b16 %v563
      %v652 = vunpack.c.l.b16 %v564
      %v653 = vunpack.c.l.b16 %v565
      %v654 = vunpack.c.h.b16 %v565
      %v655 = vunpack.c.l.b16 %v566
      %v656 = vunpack.c.l.b16 %v567
      %v657 = vunpack.c.h.b16 %v567
      %v658 = vunpack.c.l.b16 %v568
      %v659 = vunpack.c.l.b16 %v569
      %v660 = vunpack.c.h.b16 %v569
      %v661 = vunpack.c.l.b16 %v570
      %v662 = vunpack.c.l.b16 %v571
      %v663 = vunpack.c.h.b16 %v571
      %v664 = vunpack.c.l.b16 %v572
      %v665 = vunpack.c.l.b16 %v573
      %v666 = vunpack.c.h.b16 %v573
      %v667 = vunpack.c.l.b16 %v574
      %v668 = vunpack.c.l.b16 %v575
      %v669 = vunpack.c.h.b16 %v575
      %v670 = vunpack.c.l.b16 %v576
      %v671 = vunpack.c.l.b16 %v577
      %v672 = vunpack.c.h.b16 %v577
      %v673 = vunpack.c.l.b16 %v578
      %v674 = vunpack.c.l.b16 %v579
      %v675 = vunpack.c.h.b16 %v579
      %v676 = vunpack.c.l.b16 %v580
      %v677 = vunpack.c.l.b16 %v581
      %v678 = vunpack.c.h.b16 %v581
      %v679 = vunpack.c.l.b16 %v582
      %v680 = vunpack.c.l.b16 %v583
      %v681 = vunpack.c.h.b16 %v583
      %v682 = vunpack.c.l.b16 %v584
      %v683 = vunpack.c.l.b16 %v585
      %v684 = vunpack.c.h.b16 %v585
      %v685 = vunpack.c.l.b16 %v586
      %v686 = vunpack.c.l.b16 %v587
      %v687 = vunpack.c.h.b16 %v587
      %v688 = vunpack.c.l.b16 %v588
      %v689 = vunpack.c.l.b16 %v589
      %v690 = vunpack.c.h.b16 %v589
      %v691 = vunpack.c.l.b16 %v590
      %v692 = vunpack.c.l.b16 %v591
      %v693 = vunpack.c.h.b16 %v591
      %v694 = vunpack.c.l.b16 %v592
      %v695 = vunpack.c.l.b16 %v593
      %v696 = vunpack.c.h.b16 %v593
      %v697 = vunpack.c.l.b16 %v594
      %v698 = vunpack.c.l.b16 %v595
      %v699 = vunpack.c.h.b16 %v595
      %v700 = vunpack.c.l.b16 %v596
      %v701 = vunpack.c.l.b16 %v597
      %v702 = vunpack.c.h.b16 %v597
      %v703 = vunpack.c.l.b16 %v598
      %v704 = vunpack.c.l.b16 %v599
      %v705 = vunpack.c.h.b16 %v599
      %v706 = vunpack.c.l.b16 %v600
      %v707 = vpack.c.b16 %v650, %v647
      %v708 = vpack.c.b16 %v651, %v648
      %v709 = vpack.c.b16 %v652, %v649
      %v710 = vpack.c.b16 %v656, %v653
      %v711 = vpack.c.b16 %v657, %v654
      %v712 = vpack.c.b16 %v658, %v655
      %v713 = vpack.c.b16 %v662, %v659
      %v714 = vpack.c.b16 %v663, %v660
      %v715 = vpack.c.b16 %v664, %v661
      %v716 = vpack.c.b16 %v668, %v665
      %v717 = vpack.c.b16 %v669, %v666
      %v718 = vpack.c.b16 %v670, %v667
      %v719 = vpack.c.b16 %v674, %v671
      %v720 = vpack.c.b16 %v675, %v672
      %v721 = vpack.c.b16 %v676, %v673
      %v722 = vpack.c.b16 %v680, %v677
      %v723 = vpack.c.b16 %v681, %v678
      %v724 = vpack.c.b16 %v682, %v679
      %v725 = vpack.c.b16 %v686, %v683
      %v726 = vpack.c.b16 %v687, %v684
      %v727 = vpack.c.b16 %v688, %v685
      %v728 = vpack.c.b16 %v692, %v689
      %v729 = vpack.c.b16 %v693, %v690
      %v730 = vpack.c.b16 %v694, %v691
      %v731 = vpack.c.b16 %v698, %v695
      %v732 = vpack.c.b16 %v699, %v696
      %v733 = vpack.c.b16 %v700, %v697
      %v734 = vpack.c.b16 %v704, %v701
      %v735 = vpack.c.b16 %v705, %v702
      %v736 = vpack.c.b16 %v706, %v703
      %vm767 = vcmask 261120
      %v769 = vsel %vm767, %v605, 0
      %771 = vmatprep.subr.bf16.mxu0 %v729
      %772 = vmatpush1.bf16.msra.mxu0 %v728
      %773 = vmatprep.subr.bf16.mxu0 %v726
      %774 = vmatpush1.bf16.msra.mxu0 %v725
      %775 = vmatprep.subr.bf16.mxu0 %v723
      %776 = vmatpush1.bf16.msra.mxu0 %v722
      %777 = vmatprep.subr.bf16.mxu0 %v720
      %778 = vmatpush1.bf16.msra.mxu0 %v719
      %779 = vmatprep.subr.bf16.mxu0 %v717
      %780 = vmatpush1.bf16.msra.mxu0 %v716
      %781 = vmatprep.subr.bf16.mxu0 %v714
      %782 = vmatpush1.bf16.msra.mxu0 %v713
      %783 = vmatprep.subr.bf16.mxu0 %v711
      %784 = vmatpush1.bf16.msra.mxu0 %v710
      %785 = vmatprep.subr.bf16.mxu0 %v708
      %786 = vmatpush1.bf16.msra.mxu0 %v707
      %787 = vmatprep.subr.bf16.mxu0 0
      %788 = vmatpush2.bf16.msra.mxu0 0
      %789 = vmatprep.subr.bf16.mxu0 0
      %790 = vmatpush2.bf16.msra.mxu0 0
      %791 = vmatprep.subr.bf16.mxu0 0
      %792 = vmatpush2.bf16.msra.mxu0 0
      %793 = vmatprep.subr.bf16.mxu0 0
      %794 = vmatpush2.bf16.msra.mxu0 0
      %795 = vmatprep.subr.bf16.mxu0 0
      %796 = vmatpush2.bf16.msra.mxu0 0
      %797 = vmatprep.subr.bf16.mxu0 0
      %798 = vmatpush2.bf16.msra.mxu0 0
      %799 = vmatprep.subr.bf16.mxu0 %v735
      %800 = vmatpush2.bf16.msra.mxu0 %v734
      %801 = vmatprep.subr.bf16.mxu0 %v732
      %802 = vmatpush2.bf16.msra.mxu0 %v731
      %803 = vmatprep.mubr.bf16.mxu0 %v769
      %804 = vmatmul.mubr.bf16.gmra.mxu0 %v604
      %v805 = vpop.f32.mrf.mxu0
      %v806 = vadd.f32 0.0, %v805
      %v807 = vpop.f32.mrf.mxu0
      %v808 = vadd.f32 0.0, %v807
      %v809 = vpop.f32.mrf.mxu0
      %v810 = vpop.f32.mrf.mxu0
      %811 = vdwg.mxu0
      %812 = vmatprep.subr.bf16.mxu0 0
      %813 = vmatpush1.bf16.msra.mxu0 %v730
      %814 = vmatprep.subr.bf16.mxu0 0
      %815 = vmatpush1.bf16.msra.mxu0 %v727
      %816 = vmatprep.subr.bf16.mxu0 0
      %817 = vmatpush1.bf16.msra.mxu0 %v724
      %818 = vmatprep.subr.bf16.mxu0 0
      %819 = vmatpush1.bf16.msra.mxu0 %v721
      %820 = vmatprep.subr.bf16.mxu0 0
      %821 = vmatpush1.bf16.msra.mxu0 %v718
      %822 = vmatprep.subr.bf16.mxu0 0
      %823 = vmatpush1.bf16.msra.mxu0 %v715
      %824 = vmatprep.subr.bf16.mxu0 0
      %825 = vmatpush1.bf16.msra.mxu0 %v712
      %826 = vmatprep.subr.bf16.mxu0 0
      %827 = vmatpush1.bf16.msra.mxu0 %v709
      %828 = vmatprep.subr.bf16.mxu0 0
      %829 = vmatpush2.bf16.msra.mxu0 0
      %830 = vmatprep.subr.bf16.mxu0 0
      %831 = vmatpush2.bf16.msra.mxu0 0
      %832 = vmatprep.subr.bf16.mxu0 0
      %833 = vmatpush2.bf16.msra.mxu0 0
      %834 = vmatprep.subr.bf16.mxu0 0
      %835 = vmatpush2.bf16.msra.mxu0 0
      %836 = vmatprep.subr.bf16.mxu0 0
      %837 = vmatpush2.bf16.msra.mxu0 0
      %838 = vmatprep.subr.bf16.mxu0 0
      %839 = vmatpush2.bf16.msra.mxu0 0
      %840 = vmatprep.subr.bf16.mxu0 0
      %841 = vmatpush2.bf16.msra.mxu0 %v736
      %842 = vmatprep.subr.bf16.mxu0 0
      %843 = vmatpush2.bf16.msra.mxu0 %v733
      %844 = vmatprep.mubr.bf16.mxu0 %v769
      %845 = vmatmul.mubr.bf16.gmra.mxu0 %v604
      %v846 = vpop.f32.mrf.mxu0
      %v847 = vadd.f32 0.0, %v846
      %v848 = vpop.f32.mrf.mxu0
      %v849 = vpop.f32.mrf.mxu0
      %v850 = vpop.f32.mrf.mxu0
      %851 = vdwg.mxu0
      %852 = vst [vmem:[%s143] sm:$0xff] %v806
      %853 = vst [vmem:[%s143 + $0x8] sm:$0xff] %v808
      %854 = vst [vmem:[%s143 + $0x10] sm:$0xff] %v847
      %p855 = scmp.lt.s32.totalorder %s13, 1
      %s856 = scalar_select %p855, %s13, 1
      %s857 = smul.addr %s856, 3
      %s858 = smul.addr %s857, 8
      %s859 = scalar_lea.vmem %s2, %s858
      // Predicated region
      $region29: #{_custom_conv2d_impl.1} parent=27 // pred_check
        %p860 = pneg %p78
      $region30: #{_custom_conv2d_impl.1} parent=27 // pred_check_branch
        %862 = sbr.rel (%p860) target = $region32
      $region31: #{_custom_conv2d_impl.1} parent=27 // pred_region
        _
      $region32: #{_custom_conv2d_impl.1} parent=27 // pred_fallthru
        _
    $region28: #{_custom_conv2d_impl.1} parent=5 // pred_fallthru
      _
    %p863 = scmp.le.s32.totalorder 2, %s8
    // Predicated region
    $region33: #{_custom_conv2d_impl.1} parent=5 // pred_check
      %p864 = pneg %p863
    $region34: #{_custom_conv2d_impl.1} parent=5 // pred_check_branch
      %866 = sbr.rel (%p864) target = $region36
    $region35: #{_custom_conv2d_impl.1} parent=5 // pred_region
      %s867 = ssub.s32 %s8, 2
      // Predicated region
      $region37: #{_custom_conv2d_impl.1} parent=35 // pred_check
        %p868 = pneg %p84
      $region38: #{_custom_conv2d_impl.1} parent=35 // pred_check_branch
        %870 = sbr.rel (%p868) target = $region40
      $region39: #{_custom_conv2d_impl.1} parent=35 // pred_region
        %p871 = scmp.lt.s32.totalorder %s14, 1
        %s872 = scalar_select %p871, %s14, 1
        %s873 = smul.addr %s872, 3
        %s874 = smul.addr %s873, 8
        %s875 = scalar_lea.vmem %s2, %s874
      $region40: #{_custom_conv2d_impl.1} parent=35 // pred_fallthru
        _
    $region36: #{_custom_conv2d_impl.1} parent=5 // pred_fallthru
      _
  $region6: #{_custom_conv2d_impl.1} parent=0 // loop_footer
    %s12 = sadd.s32 1, %s8
  $region7: #{_custom_conv2d_impl.1} parent=0 // loop_footer_branch
    %7 = sbr.rel target = $region3
  $region8: #{_custom_conv2d_impl.1} parent=0 // loop_exit
    _

</llo_original>
